<compile_context>
chip_gen: v7x
topology: tpu7x:2x2x1
jax: 0.10.0
libtpu: 0.0.40
codegen_flags: <defaults>
</compile_context>

<pallas_src>
import jax
import jax.numpy as jnp
from jax.experimental import pallas as pl
from jax.experimental.pallas import tpu as pltpu


def _round_up(v, m):
    return (v + m - 1) // m * m


def _min_tile_rows(itemsize):
    # Sublane packing granularity: f32 -> 8, bf16/f16 -> 16, int8/fp8 -> 32.
    return {4: 8, 2: 16, 1: 32}.get(itemsize, 8)


def _pick_batch_tile(B):
    """Multiple-of-8 tile dividing B (<=128), preferring >=2 batch blocks (v7x)."""
    if B % 8 != 0:
        return B                      # whole batch in one block (output-block rule)
    tiles = [t for t in range(8, min(B, 128) + 1, 8) if B % t == 0]
    two_plus = [t for t in tiles if B // t >= 2]
    return max(two_plus) if two_plus else max(tiles)


def _pick_channel_tile(C, TB, HW, x_itemsize, w_itemsize, block_bytes):
    """Channel chunk dividing C, aligned to both dtypes' sublane packing,
    sized so one (TB, TC, HW) input buffer stays within `block_bytes`."""
    g = max(_min_tile_rows(x_itemsize), _min_tile_rows(w_itemsize))
    if C % g != 0:
        return C                      # small / odd channel count: keep it whole
    hw_pad = _round_up(HW, 128)       # lane padding of the VMEM tile
    max_tc = block_bytes // max(1, TB * hw_pad * x_itemsize)
    if max_tc >= C:
        return C
    best = g
    d = g
    while d <= C:
        if C % d == 0 and d <= max_tc:
            best = d
        d += g
    return best


def _make_pool_proj_kernel(tc, inv_hw, slice_weight):
    """Fused global-average-pool (spatial) + linear projection.

    Per grid step (b, c):
      x_ref:   (TB, TC, HW)  -- NCHW layout, spatial on the lane axis
      w_ref:   (C, D)        -- native dtype, VMEM-resident across the grid
      b_ref:   (1, D)        -- native dtype, VMEM-resident
      o_ref:   (TB, D)       -- written only on the last channel chunk
      acc_ref: (TB, D) f32   -- partial matmul accumulator across channel chunks
    """

    def kernel(x_ref, w_ref, b_ref, o_ref, acc_ref):
        c = pl.program_id(1)

        @pl.when(c == 0)
        def _():
            acc_ref[...] = jnp.zeros_like(acc_ref)

        # Spatial sum of this (TB, TC, HW) chunk, accumulated directly in f32
        # (no separate f32 copy of the input block).
        pooled = jnp.sum(x_ref[...], axis=-1, dtype=jnp.float32)      # (TB, TC)
        lhs = pooled.astype(w_ref.dtype)                              # bf16 MXU for bf16 heads
        if slice_weight:
            start = pl.multiple_of(c * tc, tc)
            w_blk = w_ref[pl.ds(start, tc), :]                        # (TC, D)
        else:
            w_blk = w_ref[...]
        acc_ref[...] += jnp.dot(lhs, w_blk, preferred_element_type=jnp.float32)

        @pl.when(c == pl.num_programs(1) - 1)
        def _():
            # mean @ W + b == (sum @ W) * (1/HW) + b
            o_ref[...] = (acc_ref[...] * inv_hw
                          + b_ref[...].astype(jnp.float32)).astype(o_ref.dtype)

    return kernel


def model_forward(x_nchw, weight, bias, *, block_bytes=4 * 1024 * 1024):
    """x_nchw: (B, C, H, W); weight: (C, D); bias: (D,). Returns (B, D) f32."""
    B, C, H, W = x_nchw.shape
    Cw, D = weight.shape
    assert Cw == C
    HW = H * W
    x_elt = x_nchw.dtype.itemsize
    w_elt = weight.dtype.itemsize

    x = x_nchw.reshape(B, C, HW)          # contiguous merge -> free, no HBM pass
    b2d = bias.reshape(1, D)              # native dtype, cast to f32 in-kernel

    TB = _pick_batch_tile(B)
    TC = _pick_channel_tile(C, TB, HW, x_elt, w_elt, block_bytes)
    n_b = B // TB
    n_c = C // TC

    kernel = _make_pool_proj_kernel(TC, 1.0 / float(HW), slice_weight=(n_c > 1))

    # VMEM budget (double-buffered input stream + resident weight/bias + out/acc).
    hw_pad = _round_up(HW, 128)
    d_pad = _round_up(D, 128)
    need = (2 * TB * _round_up(TC, 8) * hw_pad * x_elt
            + 2 * _round_up(C, 8) * d_pad * w_elt
            + 2 * 8 * d_pad * bias.dtype.itemsize
            + 2 * _round_up(TB, 8) * d_pad * 4
            + _round_up(TB, 8) * d_pad * 4)
    vmem_limit = int(min(max(need + (4 << 20), 32 << 20), 96 << 20))

    cost = pl.CostEstimate(
        flops=B * C * HW + 2 * B * C * D,
        transcendentals=0,
        bytes_accessed=(B * C * HW * x_elt + C * D * w_elt
                        + D * bias.dtype.itemsize + B * D * 4),
    )

    return pl.pallas_call(
        kernel,
        out_shape=jax.ShapeDtypeStruct((B, D), jnp.float32),
        grid_spec=pltpu.PrefetchScalarGridSpec(
            num_scalar_prefetch=0,
            grid=(n_b, n_c),                          # reduction (channel) axis last
            in_specs=[
                pl.BlockSpec((TB, TC, HW), lambda b, c: (b, c, 0)),
                pl.BlockSpec((C, D), lambda b, c: (0, 0)),   # resident weight
                pl.BlockSpec((1, D), lambda b, c: (0, 0)),   # resident bias
            ],
            out_specs=pl.BlockSpec((TB, D), lambda b, c: (b, 0)),
            scratch_shapes=[pltpu.VMEM((TB, D), jnp.float32)],
        ),
        compiler_params=pltpu.CompilerParams(
            dimension_semantics=("parallel", "arbitrary"),
            vmem_limit_bytes=vmem_limit,
        ),
        cost_estimate=cost,
    )(x, weight, b2d)


def _ref_forward(x, w, b):
    Bx, Cx, Hx, Wx = x.shape
    pooled = jnp.mean(x.reshape(Bx, Cx, Hx * Wx).astype(jnp.float32), axis=-1)
    return pooled @ w.astype(jnp.float32) + b.astype(jnp.float32)


if __name__ == "__main__":
    key = jax.random.PRNGKey(0)
    kx, kw, kb = jax.random.split(key, 3)

    # 1) canonical small shapes: f32, single batch tile, single channel chunk.
    B, C, H, W, D = 2, 4, 16, 16, 8
    x = jax.random.normal(kx, (B, C, H, W), dtype=jnp.float32)
    w = jax.random.normal(kw, (C, D), dtype=jnp.float32) * 0.1
    b = jax.random.normal(kb, (D,), dtype=jnp.float32) * 0.01
    out = jax.block_until_ready(model_forward(x, w, b))
    ref = _ref_forward(x, w, b)
    assert out.shape == (B, D)
    assert jnp.allclose(out, ref, atol=5e-3, rtol=5e-3)

    # 2) batch + channel tiling (n_b=2, n_c=4): exercises the streamed channel
    #    reduction and the in-kernel aligned slicing of the resident weight.
    B2, C2, H2, W2, D2 = 16, 32, 7, 7, 16
    x2 = jax.random.normal(kx, (B2, C2, H2, W2), dtype=jnp.float32)
    w2 = jax.random.normal(kw, (C2, D2), dtype=jnp.float32) * 0.1
    b2 = jax.random.normal(kb, (D2,), dtype=jnp.float32) * 0.01
    out2 = jax.block_until_ready(model_forward(x2, w2, b2, block_bytes=8 * 1024))
    ref2 = _ref_forward(x2, w2, b2)
    assert jnp.allclose(out2, ref2, atol=5e-3, rtol=5e-3)

    # 3) bf16 activations + bf16 weights: native-dtype path (no host-side f32
    #    weight rescale), bf16 MXU matmul with f32 accumulation.
    B3, C3, H3, W3, D3 = 8, 64, 8, 8, 128
    x3 = jax.random.normal(kx, (B3, C3, H3, W3), dtype=jnp.bfloat16)
    w3 = (jax.random.normal(kw, (C3, D3), dtype=jnp.float32) * 0.1).astype(jnp.bfloat16)
    b3 = (jax.random.normal(kb, (D3,), dtype=jnp.float32) * 0.01).astype(jnp.bfloat16)
    out3 = jax.block_until_ready(model_forward(x3, w3, b3, block_bytes=32 * 1024))
    ref3 = _ref_forward(x3, w3, b3)
    assert jnp.allclose(out3, ref3, atol=2e-2, rtol=2e-2)

    print("KERNEL_OK")
</pallas_src>

<mosaic_0001>
module attributes {stable_mosaic.version = 11 : i64} {
  func.func @kernel(%arg0: i32, %arg1: i32, %arg2: memref<2x4x256xf32, #tpu.memory_space<vmem>>, %arg3: memref<4x8xf32, #tpu.memory_space<vmem>>, %arg4: memref<1x8xf32, #tpu.memory_space<vmem>>, %arg5: memref<2x8xf32, #tpu.memory_space<vmem>>, %arg6: memref<2x8xf32, #tpu.memory_space<vmem>>) attributes {dimension_semantics = [#tpu.dimension_semantics<parallel>, #tpu.dimension_semantics<arbitrary>], iteration_bounds = array<i64: 1, 1>, scalar_prefetch = 0 : i64, scratch_operands = 1 : i64, tpu.core_type = #tpu.core_type<tc>, window_params = [{transform_indices = @transform_0, window_bounds = array<i64: 2, 4, 256>}, {pipeline_mode = #tpu.pipeline_mode<synchronous>, transform_indices = @transform_1, window_bounds = array<i64: 4, 8>}, {pipeline_mode = #tpu.pipeline_mode<synchronous>, transform_indices = @transform_2, window_bounds = array<i64: 1, 8>}, {transform_indices = @transform_3, window_bounds = array<i64: 2, 8>}]} {
    %c0_i32 = arith.constant 0 : i32
    %0 = arith.cmpi eq, %arg1, %c0_i32 : i32
    %1 = arith.extui %0 : i1 to i32
    %c0_i32_0 = arith.constant 0 : i32
    %2 = arith.cmpi ne, %1, %c0_i32_0 : i32
    scf.if %2 {
      %cst_12 = arith.constant 0.000000e+00 : f32
      %13 = vector.broadcast %cst_12 : f32 to vector<2x8xf32>
      %c0_13 = arith.constant 0 : index
      %c0_14 = arith.constant 0 : index
      %14 = vector.load %arg6[%c0_13, %c0_14] : memref<2x8xf32, #tpu.memory_space<vmem>>, vector<2x8xf32>
      tpu.vector_store %arg6[%c0_13, %c0_14], %13 {strides = array<i32>} : memref<2x8xf32, #tpu.memory_space<vmem>>, vector<2x8xf32>,
    } else {
    }
    %c0 = arith.constant 0 : index
    %c0_1 = arith.constant 0 : index
    %c0_2 = arith.constant 0 : index
    %3 = vector.load %arg2[%c0, %c0_1, %c0_2] : memref<2x4x256xf32, #tpu.memory_space<vmem>>, vector<2x4x256xf32>
    %cst = arith.constant dense<0.000000e+00> : vector<2x4xf32>
    %4 = vector.multi_reduction <add>, %3, %cst [2] : vector<2x4x256xf32> to vector<2x4xf32>
    %c0_3 = arith.constant 0 : index
    %c0_4 = arith.constant 0 : index
    %5 = vector.load %arg3[%c0_3, %c0_4] : memref<4x8xf32, #tpu.memory_space<vmem>>, vector<4x8xf32>
    %c0_5 = arith.constant 0 : index
    %c0_6 = arith.constant 0 : index
    %6 = vector.load %arg6[%c0_5, %c0_6] : memref<2x8xf32, #tpu.memory_space<vmem>>, vector<2x8xf32>
    %cst_7 = arith.constant dense<0.000000e+00> : vector<2x8xf32>
    %7 = tpu.matmul %4, %5, %cst_7 {dimension_numbers = #tpu.dot_dimension_numbers<[1], [0], [0], [1], [0, 0, 1, 1], [], []>} : vector<2x4xf32>, vector<4x8xf32>, vector<2x8xf32> -> vector<2x8xf32>
    %8 = arith.addf %6, %7 : vector<2x8xf32>
    %c0_8 = arith.constant 0 : index
    %c0_9 = arith.constant 0 : index
    %9 = vector.load %arg6[%c0_8, %c0_9] : memref<2x8xf32, #tpu.memory_space<vmem>>, vector<2x8xf32>
    tpu.vector_store %arg6[%c0_8, %c0_9], %8 {strides = array<i32>} : memref<2x8xf32, #tpu.memory_space<vmem>>, vector<2x8xf32>,
    %c0_i32_10 = arith.constant 0 : i32
    %10 = arith.cmpi eq, %arg1, %c0_i32_10 : i32
    %11 = arith.extui %10 : i1 to i32
    %c0_i32_11 = arith.constant 0 : i32
    %12 = arith.cmpi ne, %11, %c0_i32_11 : i32
    scf.if %12 {
      %c0_12 = arith.constant 0 : index
      %c0_13 = arith.constant 0 : index
      %13 = vector.load %arg6[%c0_12, %c0_13] : memref<2x8xf32, #tpu.memory_space<vmem>>, vector<2x8xf32>
      %cst_14 = arith.constant 3.906250e-03 : f32
      %14 = vector.broadcast %cst_14 : f32 to vector<2x8xf32>
      %15 = arith.mulf %13, %14 : vector<2x8xf32>
      %c0_15 = arith.constant 0 : index
      %c0_16 = arith.constant 0 : index
      %16 = vector.load %arg4[%c0_15, %c0_16] : memref<1x8xf32, #tpu.memory_space<vmem>>, vector<1x8xf32>
      %17 = vector.broadcast %16 : vector<1x8xf32> to vector<2x8xf32>
      %18 = arith.addf %15, %17 : vector<2x8xf32>
      %c0_17 = arith.constant 0 : index
      %c0_18 = arith.constant 0 : index
      %19 = vector.load %arg5[%c0_17, %c0_18] : memref<2x8xf32, #tpu.memory_space<vmem>>, vector<2x8xf32>
      tpu.vector_store %arg5[%c0_17, %c0_18], %18 {strides = array<i32>} : memref<2x8xf32, #tpu.memory_space<vmem>>, vector<2x8xf32>,
    } else {
    }
    return
  }
  func.func @transform_0(%arg0: i32, %arg1: i32) -> (i32, i32, i32) {
    %c0_i32 = arith.constant 0 : i32
    %c0_i32_0 = arith.constant 0 : i32
    return %arg0, %arg1, %c0_i32 : i32, i32, i32
  }
  func.func @transform_1(%arg0: i32, %arg1: i32) -> (i32, i32) {
    %c0_i32 = arith.constant 0 : i32
    %c0_i32_0 = arith.constant 0 : i32
    %c0_i32_1 = arith.constant 0 : i32
    return %c0_i32, %c0_i32_0 : i32, i32
  }
  func.func @transform_2(%arg0: i32, %arg1: i32) -> (i32, i32) {
    %c0_i32 = arith.constant 0 : i32
    %c0_i32_0 = arith.constant 0 : i32
    %c0_i32_1 = arith.constant 0 : i32
    return %c0_i32, %c0_i32_0 : i32, i32
  }
  func.func @transform_3(%arg0: i32, %arg1: i32) -> (i32, i32) {
    %c0_i32 = arith.constant 0 : i32
    %c0_i32_0 = arith.constant 0 : i32
    return %arg0, %c0_i32 : i32, i32
  }
}

</mosaic_0001>

<llo_original>
// kernel: tpu_custom_call.1
$region0: #{tpu_custom_call.1}
  #allocation0 [shape = 'u32[]', space=smem, size = 0x4, offset = 0x4, fixed_abs, tag = 'smem constant byte address 0x4 - core index']
  #allocation1 [shape = 'u32[144,128]{1,0:T(1,128)}', space=vmem, size = 0x12000, scoped, tag = 'internal scratch']
  #allocation2 [shape = 'f32[2,8]{1,0:T(2,128)}', space=vmem, size = 0x400, scoped, tag = 'scratch operand']
  %s0 = inlined_call_operand.hbm [shape: f32[2,4,256], index: 0, kind: input, shape index: {}]
  %s1 = inlined_call_operand.hbm [shape: f32[4,8], index: 1, kind: input, shape index: {}]
  %s2 = inlined_call_operand.vmem [shape: f32[1,8], index: 2, kind: input, shape index: {}]
  %s3 = inlined_call_operand.hbm [shape: f32[2,8], index: 3, kind: output, shape index: {}]
  %s4 = sld [smem:[#allocation0]]
  $region38: #{tpu_custom_call.1} parent=0
    _
  %s6 = ssub.s32 1, %s4
  %s7 = scalar_select 0, %s6, %s4
  $region1: #{tpu_custom_call.1} parent=0
    #allocation3 [shape = 'u8[8192]{0}', space=vmem, size = 0x2000, scoped, tag = 'input window, operand 0, single buffered']
    #allocation4 [shape = 's32[1]{0}', space=sflag, size = 0x4, scoped, tag = 'scoped memory for tpu_custom_call.1']
    #allocation5 [shape = 's32[1]{0}', space=sflag, size = 0x4, scoped, tag = 'scoped memory for tpu_custom_call.1']
    #allocation6 [shape = 'u8[2048]{0}', space=vmem, size = 0x800, scoped, tag = 'input window, operand 1, single buffered']
    #allocation7 [shape = 's32[1]{0}', space=sflag, size = 0x4, scoped, tag = 'scoped memory for tpu_custom_call.1']
    #allocation8 [shape = 'u8[1024]{0}', space=vmem, size = 0x400, scoped, tag = 'output window, operand 0, single buffered']
    %8 = vsyncpa [#allocation4], 0
    %9 = vsyncpa [#allocation7], 0
    %10 = vsyncpa [#allocation5], 0
    // Predicated region
    $region2: #{tpu_custom_call.1} parent=1 // pred_check
      _
    $region3: #{tpu_custom_call.1} parent=1 // pred_check_branch
      %12 = sbr.rel (0) target = $region5
    $region4: #{tpu_custom_call.1} parent=1 // pred_region
      %s14 = ssub.s32 256, 256
      %15 = vsyncadd [#allocation4], %s14
      %s16 = sshll.u32 [#allocation3], 4
      %s17 = int_to_ptr.vmem [resolvable:$true] %s16
      %22 = dma.hbm_to_vmem [thread:$0]  %s0, 256, %s17, [#allocation4], 128, 128, 8
    $region5: #{tpu_custom_call.1} parent=1 // pred_fallthru
      _
    // Predicated region
    $region6: #{tpu_custom_call.1} parent=1 // pred_check
      _
    $region7: #{tpu_custom_call.1} parent=1 // pred_check_branch
      %24 = sbr.rel (0) target = $region9
    $region8: #{tpu_custom_call.1} parent=1 // pred_region
      %s26 = ssub.s32 64, 64
      %27 = vsyncadd [#allocation7], %s26
      %s29 = sshll.u32 [#allocation6], 4
      %s30 = int_to_ptr.vmem [resolvable:$true] %s29
      %32 = dma.hbm_to_vmem [thread:$0]  %s1, 64, %s30, [#allocation7]
    $region9: #{tpu_custom_call.1} parent=1 // pred_fallthru
      _
    // Predicated region
    $region10: #{tpu_custom_call.1} parent=1 // pred_check
      _
    $region11: #{tpu_custom_call.1} parent=1 // pred_check_branch
      %34 = sbr.rel (0) target = $region13
    $region12: #{tpu_custom_call.1} parent=1 // pred_region
      _
    $region13: #{tpu_custom_call.1} parent=1 // pred_fallthru
      _
    // Predicated region
    $region14: #{tpu_custom_call.1} parent=1 // pred_check
      _
    $region15: #{tpu_custom_call.1} parent=1 // pred_check_branch
      %36 = sbr.rel (0) target = $region17
    $region16: #{tpu_custom_call.1} parent=1 // pred_region
      %37 = dma.done [#allocation4], 256
    $region17: #{tpu_custom_call.1} parent=1 // pred_fallthru
      _
    // Predicated region
    $region18: #{tpu_custom_call.1} parent=1 // pred_check
      _
    $region19: #{tpu_custom_call.1} parent=1 // pred_check_branch
      %39 = sbr.rel (0) target = $region21
    $region20: #{tpu_custom_call.1} parent=1 // pred_region
      %40 = dma.done [#allocation7], 64
    $region21: #{tpu_custom_call.1} parent=1 // pred_fallthru
      _
    %p41 = scmp.eq.s32.totalorder 0, 0
    // Predicated region
    $region22: #{tpu_custom_call.1} parent=1 // pred_check
      %p42 = pneg %p41
    $region23: #{tpu_custom_call.1} parent=1 // pred_check_branch
      %44 = sbr.rel (%p42) target = $region25
    $region24: #{tpu_custom_call.1} parent=1 // pred_region
      %vm45 = vcmask 58368
      %46 = vst.msk [vmem:[#allocation2] sm:$0x3] %vm45, 0.0
    $region25: #{tpu_custom_call.1} parent=1 // pred_fallthru
      _
    %v47 = vld [vmem:[#allocation3] sm:$0xff]
    %v48 = vld [vmem:[#allocation3 + $0x8] sm:$0xff]
    %v51 = vcombine.high %v47, %v47
    %v52 = vcombine.high %v48, %v48
    %vm55 = vcmask 1043456
    %v56 = vsel %vm55, %v47, 0.0
    %v57 = vsel %vm55, %v51, 0.0
    %v58 = vadd.f32 %v56, %v57
    %59 = vadd.xlane.f32.xlu0 %v58
    %v60 = vpop.xlane.xlu0 %59
    %v61 = vsel %vm55, %v48, 0.0
    %v62 = vsel %vm55, %v52, 0.0
    %v63 = vadd.f32 %v61, %v62
    %64 = vadd.xlane.f32.xlu0 %v63
    %v65 = vpop.xlane.xlu0 %64
    %v66 = vld [vmem:[#allocation6] sm:$0xf]
    %v67 = vld [vmem:[#allocation2] sm:$0x3]
    %v70 = vlaneseq
    %v71 = vand.u32 %v70, 127
    %v72 = vlaneseq
    %v73 = vshrl.u32 %v72, 7
    %v74 = vsub.s32 %v71, %v73
    %v75 = vrot.slane %v60, %v74
    %v76 = vlaneseq
    %v77 = vshrl.u32 %v76, 7
    %v78 = vsub.s32 %v71, %v77
    %v79 = vrot.slane %v65, %v78
    %vm80 = vcmask 1041409
    %v81 = vsel %vm80, %v79, %v75
    %vm82 = vcmask 31744
    %v83 = vsel %vm82, %v81, 0
    %v86 = vsel %vm55, %v66, 0
    %88 = vmatprep.subr.mxu0 0.0
    %89 = vmatpush1.msra.mxu0 %v86
    %90 = vmatprep.subr.mxu0 0.0
    %91 = vmatpush1.msra.mxu0 0.0
    %92 = vmatprep.subr.mxu0 0.0
    %93 = vmatpush1.msra.mxu0 0.0
    %94 = vmatprep.subr.mxu0 0.0
    %95 = vmatpush1.msra.mxu0 0.0
    %96 = vmatprep.subr.mxu0 0.0
    %97 = vmatpush1.msra.mxu0 0.0
    %98 = vmatprep.subr.mxu0 0.0
    %99 = vmatpush1.msra.mxu0 0.0
    %100 = vmatprep.subr.mxu0 0.0
    %101 = vmatpush1.msra.mxu0 0.0
    %102 = vmatprep.subr.mxu0 0.0
    %103 = vmatpush1.msra.mxu0 0.0
    %104 = vmatprep.subr.mxu0 0.0
    %105 = vmatpush1.msra.mxu0 0.0
    %106 = vmatprep.subr.mxu0 0.0
    %107 = vmatpush1.msra.mxu0 0.0
    %108 = vmatprep.subr.mxu0 0.0
    %109 = vmatpush1.msra.mxu0 0.0
    %110 = vmatprep.subr.mxu0 0.0
    %111 = vmatpush1.msra.mxu0 0.0
    %112 = vmatprep.subr.mxu0 0.0
    %113 = vmatpush1.msra.mxu0 0.0
    %114 = vmatprep.subr.mxu0 0.0
    %115 = vmatpush1.msra.mxu0 0.0
    %116 = vmatprep.subr.mxu0 0.0
    %117 = vmatpush1.msra.mxu0 0.0
    %118 = vmatprep.subr.mxu0 0.0
    %119 = vmatpush1.msra.mxu0 0.0
    %120 = vmatprep.subr.mxu0 0.0
    %121 = vmatpush1.msra.mxu0 0.0
    %122 = vmatprep.subr.mxu0 0.0
    %123 = vmatpush1.msra.mxu0 0.0
    %124 = vmatprep.subr.mxu0 0.0
    %125 = vmatpush1.msra.mxu0 0.0
    %126 = vmatprep.subr.mxu0 0.0
    %127 = vmatpush1.msra.mxu0 0.0
    %128 = vmatprep.subr.mxu0 0.0
    %129 = vmatpush1.msra.mxu0 0.0
    %130 = vmatprep.subr.mxu0 0.0
    %131 = vmatpush1.msra.mxu0 0.0
    %132 = vmatprep.subr.mxu0 0.0
    %133 = vmatpush1.msra.mxu0 0.0
    %134 = vmatprep.subr.mxu0 0.0
    %135 = vmatpush1.msra.mxu0 0.0
    %136 = vmatprep.subr.mxu0 0.0
    %137 = vmatpush1.msra.mxu0 0.0
    %138 = vmatprep.subr.mxu0 0.0
    %139 = vmatpush1.msra.mxu0 0.0
    %140 = vmatprep.subr.mxu0 0.0
    %141 = vmatpush1.msra.mxu0 0.0
    %142 = vmatprep.subr.mxu0 0.0
    %143 = vmatpush1.msra.mxu0 0.0
    %144 = vmatprep.subr.mxu0 0.0
    %145 = vmatpush1.msra.mxu0 0.0
    %146 = vmatprep.subr.mxu0 0.0
    %147 = vmatpush1.msra.mxu0 0.0
    %148 = vmatprep.subr.mxu0 0.0
    %149 = vmatpush1.msra.mxu0 0.0
    %150 = vmatprep.subr.mxu0 0.0
    %151 = vmatpush1.msra.mxu0 0.0
    %152 = vmatprep.mubr.f32.mxu0 0.0
    %153 = vmatmul.mubr.f32.gmra.mrb[0].mxu0 %v83
    %v154 = vpop.f32.mrb[0].mxu0
    %v155 = vadd.f32 0.0, %v154
    %v156 = vpop.f32.mrb[0].mxu0
    %157 = vdwg.mxu0
    %v158 = vadd.f32 %v67, %v155
    %vm159 = vcmask 58368
    %160 = vst.msk [vmem:[#allocation2] sm:$0x3] %vm159, %v158
    // Predicated region
    $region26: #{tpu_custom_call.1} parent=1 // pred_check
      %p161 = pneg %p41
    $region27: #{tpu_custom_call.1} parent=1 // pred_check_branch
      %163 = sbr.rel (%p161) target = $region29
    $region28: #{tpu_custom_call.1} parent=1 // pred_region
      %v164 = vld [vmem:[#allocation2] sm:$0x3]
      %v165 = vmul.f32 %v164, 0.00390625
      %v166 = vld [vmem:[%s2] sm:$0x1]
      %v168 = vlaneseq
      %v169 = vshrl.u32 %v168, 7
      %v170 = vsub.s32 0, %v169
      %v171 = vrot.slane %v166, %v170
      %v173 = vadd.f32 %v165, %v171
      %174 = vst.msk [vmem:[#allocation8] sm:$0x3] %vm159, %v173
    $region29: #{tpu_custom_call.1} parent=1 // pred_fallthru
      _
    // Predicated region
    $region30: #{tpu_custom_call.1} parent=1 // pred_check
      _
    $region31: #{tpu_custom_call.1} parent=1 // pred_check_branch
      %176 = sbr.rel (0) target = $region33
    $region32: #{tpu_custom_call.1} parent=1 // pred_region
      %s178 = ssub.s32 32, 32
      %179 = vsyncadd [#allocation5], %s178
      %s181 = sshll.u32 [#allocation8], 4
      %s182 = int_to_ptr.vmem [resolvable:$true] %s181
      %184 = dma.vmem_to_hbm [thread:$0]  %s182, 32, %s3, [#allocation5]
    $region33: #{tpu_custom_call.1} parent=1 // pred_fallthru
      _
    // Predicated region
    $region34: #{tpu_custom_call.1} parent=1 // pred_check
      _
    $region35: #{tpu_custom_call.1} parent=1 // pred_check_branch
      %186 = sbr.rel (0) target = $region37
    $region36: #{tpu_custom_call.1} parent=1 // pred_region
      %187 = dma.done [#allocation5], 32
    $region37: #{tpu_custom_call.1} parent=1 // pred_fallthru
      _
    %188 = vsyncpa [#allocation4], 1
    %189 = vsyncpa [#allocation7], 1
    %190 = vsyncpa [#allocation5], 1

</llo_original>
